<compile_context>
chip_gen: v7x
topology: tpu7x:2x2x1
jax: 0.10.0
libtpu: 0.0.40
codegen_flags: <defaults>
</compile_context>

<pallas_src>
import functools
import math

import jax
import jax.numpy as jnp
from jax import lax
from jax.experimental import pallas as pl
from jax.experimental.pallas import tpu as pltpu

_LANE = 128
_VMEM_LIMIT = 32 * 1024 * 1024


def _round_up(n, m):
    return ((n + m - 1) // m) * m


def _slab_geometry(d1, p, max_tile_rows=512):
    """Rows / tile size for the packed (rows, 256) spike-and-slab slabs."""
    n_valid = d1 * p + d1                        # elements per 128-lane half
    rows = -(-n_valid // _LANE)
    tile = min(max_tile_rows, _round_up(rows, 8))
    rows = _round_up(rows, tile)
    return n_valid, rows, tile


def _pack_half(a, b, rows):
    flat = jnp.concatenate([a.reshape(-1), b.reshape(-1)]).astype(jnp.float32)
    flat = jnp.pad(flat, (0, rows * _LANE - flat.shape[0]))
    return flat.reshape(rows, _LANE)


def _pack_quantity(main_mean, bias_mean, main_std, bias_std, rows):
    """Lanes 0..127: [qUmain_* | qUbias_*] of the 'mean' groups; lanes 128..255: the 'std' groups."""
    return jnp.concatenate([_pack_half(main_mean, bias_mean, rows),
                            _pack_half(main_std, bias_std, rows)], axis=1)


# ---------------------------------------------------------------------------
# Kernel 1: spike-and-slab reparameterisation of all four parameter groups
# + spike-and-slab KLs + gaussian KLs of the sampled weights, tiled over rows.
# ---------------------------------------------------------------------------
def _spike_slab_kernel(mu_ref, rho_ref, th_ref, eps_ref, g_ref, w_ref, kl_ref, *,
                       inv_temp, log_phi_prior, log_1m_phi_prior,
                       log_sigma_prior, half_inv_sp2, n_valid):
    pid = pl.program_id(0)

    @pl.when(pid == 0)
    def _():
        kl_ref[...] = jnp.zeros_like(kl_ref)

    mu = mu_ref[...]
    rho = rho_ref[...]
    theta = th_ref[...]

    # overflow-safe softplus(rho)
    sigma_w = jnp.where(rho > 20.0, rho,
                        jnp.log(1.0 + jnp.exp(jnp.minimum(rho, 20.0))))

    # gumbel-softmax gate; the uniform-logit noise g = log(u+eps)-log(1-u+eps)
    # is precomputed in glue (one fewer in-kernel transcendental).
    gamma = 1.0 / (1.0 + jnp.exp(-(theta + g_ref[...]) * inv_temp))

    w = gamma * (mu + sigma_w * eps_ref[...])
    w_ref[...] = w

    # validity mask over the end-padded flat layout (identical for both halves)
    tr, tc = mu.shape
    rows = lax.broadcasted_iota(jnp.int32, (tr, tc), 0) + pid * tr
    cols = lax.broadcasted_iota(jnp.int32, (tr, tc), 1) & (_LANE - 1)
    mask = ((rows * _LANE + cols) < n_valid).astype(jnp.float32)

    # spike-and-slab KL; log(1-phi) = log(phi) - theta saves 2 transcendentals/elem
    e_neg = jnp.exp(jnp.minimum(-theta, 60.0))
    log_phi = -jnp.log(1.0 + e_neg)              # log sigmoid(theta)
    log_1m_phi = log_phi - theta                 # log sigmoid(-theta)
    phi = 1.0 / (1.0 + e_neg)                    # sigmoid(theta), exact
    kl = (phi * (log_phi - log_phi_prior)
          + (1.0 - phi) * (log_1m_phi - log_1m_phi_prior)
          + phi * (log_sigma_prior - jnp.log(sigma_w)
                   + half_inv_sp2 * (sigma_w * sigma_w + mu * mu) - 0.5)) * mask

    # gaussian KL of sampled (mean, std) halves: 0.5*sum(1 + s - m^2 - exp(s))
    half = tc // 2
    wm = w[:, :half]
    ws = w[:, half:]
    gkl = (1.0 + ws - wm * wm - jnp.exp(ws)) * mask[:, :half]

    part = (jnp.sum(kl, axis=1, keepdims=True).sum(axis=0, keepdims=True)
            + 0.5 * jnp.sum(gkl, axis=1, keepdims=True).sum(axis=0, keepdims=True))
    kl_ref[...] += part


def spike_slab_sample_and_kl(params, key_eps, key_u, temperature, phi_prior, sigma_prior):
    d1, p = params['qUmain_mean_w_mu'].shape
    n_valid, rows, tile = _slab_geometry(d1, p)

    mu_slab = _pack_quantity(params['qUmain_mean_w_mu'], params['qUbias_mean_w_mu'],
                             params['qUmain_std_w_mu'], params['qUbias_std_w_mu'], rows)
    rho_slab = _pack_quantity(params['qUmain_mean_w_rho'], params['qUbias_mean_w_rho'],
                              params['qUmain_std_w_rho'], params['qUbias_std_w_rho'], rows)
    th_slab = _pack_quantity(params['qUmain_mean_w_theta'], params['qUbias_mean_w_theta'],
                             params['qUmain_std_w_theta'], params['qUbias_std_w_theta'], rows)

    # noise drawn directly in the packed lane-dense layout (iid, so equivalent)
    eps_slab = jax.random.normal(key_eps, (rows, 2 * _LANE), jnp.float32)
    u = jax.random.uniform(key_u, (rows, 2 * _LANE), jnp.float32)
    g_slab = jnp.log(u + 1e-20) - jnp.log(1.0 - u + 1e-20)

    kern = functools.partial(
        _spike_slab_kernel,
        inv_temp=float(1.0 / temperature),
        log_phi_prior=float(math.log(phi_prior)),
        log_1m_phi_prior=float(math.log(1.0 - phi_prior)),
        log_sigma_prior=float(math.log(sigma_prior)),
        half_inv_sp2=float(0.5 / (sigma_prior * sigma_prior)),
        n_valid=int(n_valid))

    w_slab, kl = pl.pallas_call(
        kern,
        out_shape=(jax.ShapeDtypeStruct((rows, 2 * _LANE), jnp.float32),
                   jax.ShapeDtypeStruct((1, 1), jnp.float32)),
        grid=(rows // tile,),
        in_specs=[pl.BlockSpec((tile, 2 * _LANE), lambda i: (i, 0))] * 5,
        out_specs=(pl.BlockSpec((tile, 2 * _LANE), lambda i: (i, 0)),
                   pl.BlockSpec((1, 1), lambda i: (0, 0))),
        compiler_params=pltpu.CompilerParams(
            dimension_semantics=("arbitrary",),   # KL output accumulates across rows
            vmem_limit_bytes=_VMEM_LIMIT),
    )(mu_slab, rho_slab, th_slab, eps_slab, g_slab)

    mean_flat = w_slab[:, :_LANE].reshape(-1)[:n_valid]
    std_flat = w_slab[:, _LANE:].reshape(-1)[:n_valid]
    W_Umain_mean = mean_flat[:d1 * p].reshape(d1, p)
    W_Ubias_mean = mean_flat[d1 * p:].reshape(d1, 1)
    W_Umain_std = std_flat[:d1 * p].reshape(d1, p)
    W_Ubias_std = std_flat[d1 * p:].reshape(d1, 1)
    return (W_Umain_mean, W_Umain_std, W_Ubias_mean, W_Ubias_std), kl[0, 0]


# ---------------------------------------------------------------------------
# Kernel 2: V projection (two lane-aligned MXU matmuls) + reparameterised qV
# sample + multinomial log-likelihood reduction + gaussian KL of V weights/bias.
# Tiled over the batch; weights stay resident; output is a (1,1) scalar
#   = norm * log_prob_y + kl_V_main + kl_V_bias
# ---------------------------------------------------------------------------
def _v_loglik_kernel(qU_ref, wm_ref, ws_ref, bm_ref, bs_ref, eps_ref, y_ref, rc_ref,
                     out_ref, *, norm):
    pid = pl.program_id(0)

    @pl.when(pid == 0)
    def _():
        wm = wm_ref[...]
        ws = ws_ref[...]
        bm = bm_ref[...]
        bs = bs_ref[...]
        kl_w = 1.0 + ws - wm * wm - jnp.exp(ws)
        kl_b = 1.0 + bs - bm * bm - jnp.exp(bs)
        out_ref[...] = 0.5 * (
            jnp.sum(kl_w, axis=1, keepdims=True).sum(axis=0, keepdims=True)
            + jnp.sum(kl_b, axis=1, keepdims=True).sum(axis=0, keepdims=True))

    qU = qU_ref[...]
    mean = jnp.dot(qU, wm_ref[...], preferred_element_type=jnp.float32) + bm_ref[...]
    logvar = jnp.dot(qU, ws_ref[...], preferred_element_type=jnp.float32) + bs_ref[...]
    qV = mean + eps_ref[...] * jnp.exp(0.5 * logvar)

    # multinomial "log power": sum_j y_ij * log_softmax(qV_i)_j
    m = jnp.max(qV, axis=-1, keepdims=True)
    lse = m + jnp.log(jnp.sum(jnp.exp(qV - m), axis=-1, keepdims=True))
    log_pow = jnp.sum(y_ref[...] * (qV - lse), axis=-1, keepdims=True)      # (TQ,1)

    rc = rc_ref[...]                              # (TQ, 2): [masked lgamma, validity mask]
    row_lp = rc[:, 0:1] + rc[:, 1:2] * log_pow
    out_ref[...] += norm * jnp.sum(row_lp, axis=0, keepdims=True)


def v_loglik_and_kl(qU, mean_w, std_w, mean_b, std_b, eps_v, y_round, row_consts, norm):
    B, p = qU.shape
    d2 = mean_w.shape[1]
    tq = min(128, _round_up(B, 8))
    B_pad = _round_up(B, tq)
    pad = B_pad - B
    if pad:
        qU = jnp.pad(qU, ((0, pad), (0, 0)))
        eps_v = jnp.pad(eps_v, ((0, pad), (0, 0)))
        y_round = jnp.pad(y_round, ((0, pad), (0, 0)))
        row_consts = jnp.pad(row_consts, ((0, pad), (0, 0)))

    out = pl.pallas_call(
        functools.partial(_v_loglik_kernel, norm=float(norm)),
        out_shape=jax.ShapeDtypeStruct((1, 1), jnp.float32),
        grid=(B_pad // tq,),
        in_specs=[
            pl.BlockSpec((tq, p), lambda i: (i, 0)),    # qU batch tile
            pl.BlockSpec((p, d2), lambda i: (0, 0)),    # V mean weight (resident)
            pl.BlockSpec((p, d2), lambda i: (0, 0)),    # V logvar weight (resident)
            pl.BlockSpec((1, d2), lambda i: (0, 0)),    # V mean bias
            pl.BlockSpec((1, d2), lambda i: (0, 0)),    # V logvar bias
            pl.BlockSpec((tq, d2), lambda i: (i, 0)),   # eps_v tile
            pl.BlockSpec((tq, d2), lambda i: (i, 0)),   # rounded Y tile
            pl.BlockSpec((tq, 2), lambda i: (i, 0)),    # merged (lgamma, validity)
        ],
        out_specs=pl.BlockSpec((1, 1), lambda i: (0, 0)),
        compiler_params=pltpu.CompilerParams(
            dimension_semantics=("arbitrary",),
            vmem_limit_bytes=_VMEM_LIMIT),
    )(qU, mean_w, std_w, mean_b, std_b, eps_v, y_round, row_consts)
    return out[0, 0]


# ---------------------------------------------------------------------------
# Parameter init (deterministic; matches __init__ shapes, ssprior='normal').
# V-projection Linear weights are stored pre-transposed as (p, d2), biases (1, d2).
# ---------------------------------------------------------------------------
def init_params(key, d1, d2, p):
    keys = jax.random.split(key, 16)

    def norm_(k, shape):
        return jax.random.normal(k, shape, jnp.float32)

    def theta_init(k, shape):
        u = jax.random.uniform(k, shape, jnp.float32, 1e-3, 1.0 - 1e-3)
        return jnp.log(u / (1.0 - u))

    bound = 1.0 / math.sqrt(p)

    def lin(k, shape):
        return jax.random.uniform(k, shape, jnp.float32, -bound, bound)

    return dict(
        qUmain_mean_w_mu=norm_(keys[0], (d1, p)),
        qUmain_mean_w_rho=norm_(keys[1], (d1, p)),
        qUmain_mean_w_theta=theta_init(keys[2], (d1, p)),
        qUmain_std_w_mu=norm_(keys[3], (d1, p)),
        qUmain_std_w_rho=norm_(keys[4], (d1, p)),
        qUmain_std_w_theta=theta_init(keys[5], (d1, p)),
        qUbias_mean_w_mu=norm_(keys[6], (d1, 1)),
        qUbias_mean_w_rho=norm_(keys[7], (d1, 1)),
        qUbias_mean_w_theta=theta_init(keys[8], (d1, 1)),
        qUbias_std_w_mu=norm_(keys[9], (d1, 1)),
        qUbias_std_w_rho=norm_(keys[10], (d1, 1)),
        qUbias_std_w_theta=theta_init(keys[11], (d1, 1)),
        # stored pre-transposed (in_features, out_features) = (p, d2)
        qVmain_mean_w=lin(keys[12], (p, d2)),
        qVmain_mean_b=lin(keys[13], (1, d2)),
        qVmain_std_w=lin(keys[14], (p, d2)),
        qVmain_std_b=lin(keys[15], (1, d2)),
    )


# ---------------------------------------------------------------------------
# Forward pass (training loss = -ELBO)
# ---------------------------------------------------------------------------
def vbayesmm_forward(params, X_rows, X_cols, X_vals, Y, key, *,
                     batch_size, temperature, phi_prior, sigma_prior):
    nnz = X_vals.shape[0]
    d2 = params['qVmain_mean_w'].shape[1]

    ks = jax.random.split(key, 6)

    # --- multinomial selection over nonzero entries (glue; stochastic) ---
    logits = jnp.log(jnp.maximum(X_vals, 1e-6)).astype(jnp.float32)
    logits = logits - jax.scipy.special.logsumexp(logits)
    probs = jnp.exp(logits)
    eps_c = 1e-8
    adjusted = (probs + eps_c) / (1.0 + eps_c * nnz)
    draws = jax.random.categorical(ks[0], jnp.log(adjusted), shape=(batch_size,))
    # NOTE: the reference module uses the multinomial COUNTS as INDICES into the
    # COO index arrays; this quirk is reproduced intentionally for parity.
    batch_ids = jnp.bincount(draws, length=nnz)
    sample_ids = X_rows[batch_ids]
    X_batch = X_cols[batch_ids]
    Y_batch = Y[sample_ids]
    norm = nnz / batch_size
    total_count = jnp.sum(Y, axis=1)
    tc = total_count[sample_ids]

    # --- fused spike-and-slab sampling + all U KL terms (ONE Pallas launch) ---
    (W_Umain_mean, W_Umain_std, W_Ubias_mean, W_Ubias_std), kl_U_total = \
        spike_slab_sample_and_kl(params, ks[1], ks[2], temperature, phi_prior, sigma_prior)

    # --- embedding lookup + gaussian reparameterisation (glue; tiny gather) ---
    umain_mean = jnp.take(W_Umain_mean, X_batch, axis=0)
    umain_std = jnp.exp(0.5 * jnp.take(W_Umain_std, X_batch, axis=0))
    qUmain = umain_mean + jax.random.normal(ks[3], umain_mean.shape) * umain_std
    ubias_mean = jnp.take(W_Ubias_mean, X_batch, axis=0)
    ubias_std = jnp.exp(0.5 * jnp.take(W_Ubias_std, X_batch, axis=0))
    qUbias = ubias_mean + jax.random.normal(ks[4], ubias_mean.shape) * ubias_std
    qU = qUmain + qUbias                                          # (B, p), B = nnz

    # --- likelihood side inputs (glue) ---
    B = qU.shape[0]
    eps_v = jax.random.normal(ks[5], (B, d2), jnp.float32)
    Y_round = jnp.round(Y_batch)
    # TODO(synk): lgamma has no clean Pallas/Mosaic lowering; factorial terms stay in glue.
    lgamma_terms = (lax.lgamma(jnp.sum(Y_round, axis=1) + 1.0)
                    - jnp.sum(lax.lgamma(Y_round + 1.0), axis=1))
    # rows whose rounded count differs from the sample total are skipped (ref `continue`)
    valid = jnp.sum(Y_round, axis=1) == tc
    row_consts = jnp.stack([jnp.where(valid, lgamma_terms, 0.0),
                            valid.astype(jnp.float32)], axis=1)   # (B, 2)

    # --- fused V projection + multinomial log-likelihood + V KLs (ONE launch) ---
    lik_plus_klV = v_loglik_and_kl(
        qU, params['qVmain_mean_w'], params['qVmain_std_w'],
        params['qVmain_mean_b'], params['qVmain_std_b'],
        eps_v, Y_round, row_consts, norm)

    # reference adds every term (whatever its sign convention) into the ELBO
    ELBO = lik_plus_klV + kl_U_total
    return -ELBO


if __name__ == "__main__":
    # small shapes: d1 microbes, d2 metabolites, p latent dims
    d1, d2, p = 16, 128, 8
    num_samples, batch_size = 8, 8
    temperature = 0.5

    key = jax.random.PRNGKey(0)
    k_params, k_data, k_fwd = jax.random.split(key, 3)

    params = init_params(k_params, d1, d2, p)

    # synthetic coalesced sparse microbiome matrix X (COO) of shape (num_samples, d1)
    nnz = 16
    X_rows = jnp.repeat(jnp.arange(num_samples, dtype=jnp.int32), 2)      # sorted rows
    X_cols = jnp.tile(jnp.array([2, 9], dtype=jnp.int32), num_samples)    # unique (row, col)
    X_vals = jax.random.uniform(jax.random.fold_in(k_data, 0), (nnz,), jnp.float32, 0.5, 5.0)
    # integer-valued metabolite counts Y (num_samples, d2)
    Y = jnp.round(jax.random.uniform(jax.random.fold_in(k_data, 1),
                                     (num_samples, d2), jnp.float32, 0.0, 10.0))

    # priors (same formulas as the module __init__)
    total = (d1 + 1) * p
    a = math.log(total) + 0.1 * (2.0 * math.log(d1) + math.log(math.sqrt(num_samples) * d1))
    phi_prior = 1.0 / math.exp(a)
    sigma_prior = math.log(1.0 + math.exp(math.log(math.exp(1.3) - 1.0)))  # = 1.3

    fwd = jax.jit(functools.partial(vbayesmm_forward,
                                    batch_size=batch_size,
                                    temperature=temperature,
                                    phi_prior=phi_prior,
                                    sigma_prior=sigma_prior))
    loss = fwd(params, X_rows, X_cols, X_vals, Y, k_fwd)
    jax.block_until_ready(loss)
    assert jnp.isfinite(loss), "loss is not finite"
    print("KERNEL_OK")
</pallas_src>

<mosaic_0001>
module attributes {stable_mosaic.version = 11 : i64} {
  func.func @_spike_slab_kernel(%arg0: i32, %arg1: memref<8x256xf32, #tpu.memory_space<vmem>>, %arg2: memref<8x256xf32, #tpu.memory_space<vmem>>, %arg3: memref<8x256xf32, #tpu.memory_space<vmem>>, %arg4: memref<8x256xf32, #tpu.memory_space<vmem>>, %arg5: memref<8x256xf32, #tpu.memory_space<vmem>>, %arg6: memref<8x256xf32, #tpu.memory_space<vmem>>, %arg7: memref<1x1xf32, #tpu.memory_space<vmem>>) attributes {dimension_semantics = [#tpu.dimension_semantics<arbitrary>], iteration_bounds = array<i64: 1>, scalar_prefetch = 0 : i64, scratch_operands = 0 : i64, tpu.core_type = #tpu.core_type<tc>, window_params = [{transform_indices = @transform_0, window_bounds = array<i64: 8, 256>}, {transform_indices = @transform_1, window_bounds = array<i64: 8, 256>}, {transform_indices = @transform_2, window_bounds = array<i64: 8, 256>}, {transform_indices = @transform_3, window_bounds = array<i64: 8, 256>}, {transform_indices = @transform_4, window_bounds = array<i64: 8, 256>}, {transform_indices = @transform_5, window_bounds = array<i64: 8, 256>}, {pipeline_mode = #tpu.pipeline_mode<synchronous>, transform_indices = @transform_6, window_bounds = array<i64: 1, 1>}]} {
    %c0_i32 = arith.constant 0 : i32
    %0 = arith.cmpi eq, %arg0, %c0_i32 : i32
    %1 = arith.extui %0 : i1 to i32
    %c0_i32_0 = arith.constant 0 : i32
    %2 = arith.cmpi ne, %1, %c0_i32_0 : i32
    scf.if %2 {
      %cst_40 = arith.constant 0.000000e+00 : f32
      %107 = vector.broadcast %cst_40 : f32 to vector<1x1xf32>
      %c0_41 = arith.constant 0 : index
      %c0_42 = arith.constant 0 : index
      %108 = vector.load %arg7[%c0_41, %c0_42] : memref<1x1xf32, #tpu.memory_space<vmem>>, vector<1x1xf32>
      tpu.vector_store %arg7[%c0_41, %c0_42], %107 {strides = array<i32>} : memref<1x1xf32, #tpu.memory_space<vmem>>, vector<1x1xf32>,
    } else {
    }
    %c0 = arith.constant 0 : index
    %c0_1 = arith.constant 0 : index
    %3 = vector.load %arg1[%c0, %c0_1] : memref<8x256xf32, #tpu.memory_space<vmem>>, vector<8x256xf32>
    %c0_2 = arith.constant 0 : index
    %c0_3 = arith.constant 0 : index
    %4 = vector.load %arg2[%c0_2, %c0_3] : memref<8x256xf32, #tpu.memory_space<vmem>>, vector<8x256xf32>
    %c0_4 = arith.constant 0 : index
    %c0_5 = arith.constant 0 : index
    %5 = vector.load %arg3[%c0_4, %c0_5] : memref<8x256xf32, #tpu.memory_space<vmem>>, vector<8x256xf32>
    %cst = arith.constant 2.000000e+01 : f32
    %6 = vector.broadcast %cst : f32 to vector<8x256xf32>
    %7 = arith.cmpf ogt, %4, %6 : vector<8x256xf32>
    %cst_6 = arith.constant 2.000000e+01 : f32
    %8 = vector.broadcast %cst_6 : f32 to vector<8x256xf32>
    %9 = arith.minimumf %4, %8 : vector<8x256xf32>
    %10 = math.exp %9 : vector<8x256xf32>
    %cst_7 = arith.constant 1.000000e+00 : f32
    %11 = vector.broadcast %cst_7 : f32 to vector<8x256xf32>
    %12 = arith.addf %11, %10 : vector<8x256xf32>
    %13 = math.log %12 : vector<8x256xf32>
    %14 = arith.select %7, %4, %13 : vector<8x256xi1>, vector<8x256xf32>
    %c0_8 = arith.constant 0 : index
    %c0_9 = arith.constant 0 : index
    %15 = vector.load %arg5[%c0_8, %c0_9] : memref<8x256xf32, #tpu.memory_space<vmem>>, vector<8x256xf32>
    %16 = arith.addf %5, %15 : vector<8x256xf32>
    %cst_10 = arith.constant 0.000000e+00 : f32
    %17 = vector.broadcast %cst_10 : f32 to vector<8x256xf32>
    %18 = arith.subf %17, %16 : vector<8x256xf32>
    %cst_11 = arith.constant 2.000000e+00 : f32
    %19 = vector.broadcast %cst_11 : f32 to vector<8x256xf32>
    %20 = arith.mulf %18, %19 : vector<8x256xf32>
    %21 = math.exp %20 : vector<8x256xf32>
    %cst_12 = arith.constant 1.000000e+00 : f32
    %22 = vector.broadcast %cst_12 : f32 to vector<8x256xf32>
    %23 = arith.addf %22, %21 : vector<8x256xf32>
    %cst_13 = arith.constant 1.000000e+00 : f32
    %24 = vector.broadcast %cst_13 : f32 to vector<8x256xf32>
    %25 = arith.divf %24, %23 : vector<8x256xf32>
    %c0_14 = arith.constant 0 : index
    %c0_15 = arith.constant 0 : index
    %26 = vector.load %arg4[%c0_14, %c0_15] : memref<8x256xf32, #tpu.memory_space<vmem>>, vector<8x256xf32>
    %27 = arith.mulf %14, %26 : vector<8x256xf32>
    %28 = arith.addf %3, %27 : vector<8x256xf32>
    %29 = arith.mulf %25, %28 : vector<8x256xf32>
    %c0_16 = arith.constant 0 : index
    %c0_17 = arith.constant 0 : index
    %30 = vector.load %arg6[%c0_16, %c0_17] : memref<8x256xf32, #tpu.memory_space<vmem>>, vector<8x256xf32>
    tpu.vector_store %arg6[%c0_16, %c0_17], %29 {strides = array<i32>} : memref<8x256xf32, #tpu.memory_space<vmem>>, vector<8x256xf32>,
    %31 = tpu.iota {dimensions = array<i32: 0>} : vector<8x256xi32>
    %c8_i32 = arith.constant 8 : i32
    %32 = arith.muli %arg0, %c8_i32 : i32
    %33 = vector.broadcast %32 : i32 to vector<8x256xi32>
    %34 = arith.addi %31, %33 : vector<8x256xi32>
    %35 = tpu.iota {dimensions = array<i32: 1>} : vector<8x256xi32>
    %c127_i32 = arith.constant 127 : i32
    %36 = vector.broadcast %c127_i32 : i32 to vector<8x256xi32>
    %37 = arith.andi %35, %36 : vector<8x256xi32>
    %c128_i32 = arith.constant 128 : i32
    %38 = vector.broadcast %c128_i32 : i32 to vector<8x256xi32>
    %39 = arith.muli %34, %38 : vector<8x256xi32>
    %40 = arith.addi %39, %37 : vector<8x256xi32>
    %c144_i32 = arith.constant 144 : i32
    %41 = vector.broadcast %c144_i32 : i32 to vector<8x256xi32>
    %42 = arith.cmpi slt, %40, %41 : vector<8x256xi32>
    %43 = arith.extui %42 : vector<8x256xi1> to vector<8x256xi32>
    %44 = arith.sitofp %43 : vector<8x256xi32> to vector<8x256xf32>
    %cst_18 = arith.constant 0.000000e+00 : f32
    %45 = vector.broadcast %cst_18 : f32 to vector<8x256xf32>
    %46 = arith.subf %45, %5 : vector<8x256xf32>
    %cst_19 = arith.constant 6.000000e+01 : f32
    %47 = vector.broadcast %cst_19 : f32 to vector<8x256xf32>
    %48 = arith.minimumf %46, %47 : vector<8x256xf32>
    %49 = math.exp %48 : vector<8x256xf32>
    %cst_20 = arith.constant 1.000000e+00 : f32
    %50 = vector.broadcast %cst_20 : f32 to vector<8x256xf32>
    %51 = arith.addf %50, %49 : vector<8x256xf32>
    %52 = math.log %51 : vector<8x256xf32>
    %cst_21 = arith.constant 0.000000e+00 : f32
    %53 = vector.broadcast %cst_21 : f32 to vector<8x256xf32>
    %54 = arith.subf %53, %52 : vector<8x256xf32>
    %55 = arith.subf %54, %5 : vector<8x256xf32>
    %cst_22 = arith.constant 1.000000e+00 : f32
    %56 = vector.broadcast %cst_22 : f32 to vector<8x256xf32>
    %57 = arith.addf %56, %49 : vector<8x256xf32>
    %cst_23 = arith.constant 1.000000e+00 : f32
    %58 = vector.broadcast %cst_23 : f32 to vector<8x256xf32>
    %59 = arith.divf %58, %57 : vector<8x256xf32>
    %cst_24 = arith.constant -5.84840345 : f32
    %60 = vector.broadcast %cst_24 : f32 to vector<8x256xf32>
    %61 = arith.subf %54, %60 : vector<8x256xf32>
    %62 = arith.mulf %59, %61 : vector<8x256xf32>
    %cst_25 = arith.constant 1.000000e+00 : f32
    %63 = vector.broadcast %cst_25 : f32 to vector<8x256xf32>
    %64 = arith.subf %63, %59 : vector<8x256xf32>
    %cst_26 = arith.constant -0.00288866856 : f32
    %65 = vector.broadcast %cst_26 : f32 to vector<8x256xf32>
    %66 = arith.subf %55, %65 : vector<8x256xf32>
    %67 = arith.mulf %64, %66 : vector<8x256xf32>
    %68 = arith.addf %62, %67 : vector<8x256xf32>
    %69 = math.log %14 : vector<8x256xf32>
    %cst_27 = arith.constant 0.262364268 : f32
    %70 = vector.broadcast %cst_27 : f32 to vector<8x256xf32>
    %71 = arith.subf %70, %69 : vector<8x256xf32>
    %72 = arith.mulf %14, %14 : vector<8x256xf32>
    %73 = arith.mulf %3, %3 : vector<8x256xf32>
    %74 = arith.addf %72, %73 : vector<8x256xf32>
    %cst_28 = arith.constant 2.958580e-01 : f32
    %75 = vector.broadcast %cst_28 : f32 to vector<8x256xf32>
    %76 = arith.mulf %75, %74 : vector<8x256xf32>
    %77 = arith.addf %71, %76 : vector<8x256xf32>
    %cst_29 = arith.constant 5.000000e-01 : f32
    %78 = vector.broadcast %cst_29 : f32 to vector<8x256xf32>
    %79 = arith.subf %77, %78 : vector<8x256xf32>
    %80 = arith.mulf %59, %79 : vector<8x256xf32>
    %81 = arith.addf %68, %80 : vector<8x256xf32>
    %82 = arith.mulf %81, %44 : vector<8x256xf32>
    %83 = vector.extract_strided_slice %29 {offsets = [0, 0], sizes = [8, 128], strides = [1, 1]} : vector<8x256xf32> to vector<8x128xf32>
    %84 = vector.extract_strided_slice %29 {offsets = [0, 128], sizes = [8, 128], strides = [1, 1]} : vector<8x256xf32> to vector<8x128xf32>
    %cst_30 = arith.constant 1.000000e+00 : f32
    %85 = vector.broadcast %cst_30 : f32 to vector<8x128xf32>
    %86 = arith.addf %85, %84 : vector<8x128xf32>
    %87 = arith.mulf %83, %83 : vector<8x128xf32>
    %88 = arith.subf %86, %87 : vector<8x128xf32>
    %89 = math.exp %84 : vector<8x128xf32>
    %90 = arith.subf %88, %89 : vector<8x128xf32>
    %91 = vector.extract_strided_slice %44 {offsets = [0, 0], sizes = [8, 128], strides = [1, 1]} : vector<8x256xf32> to vector<8x128xf32>
    %92 = arith.mulf %90, %91 : vector<8x128xf32>
    %cst_31 = arith.constant dense<0.000000e+00> : vector<8xf32>
    %93 = vector.multi_reduction <add>, %82, %cst_31 [1] : vector<8x256xf32> to vector<8xf32>
    %94 = vector.shape_cast %93 : vector<8xf32> to vector<8x1xf32>
    %cst_32 = arith.constant dense<0.000000e+00> : vector<1xf32>
    %95 = vector.multi_reduction <add>, %94, %cst_32 [0] : vector<8x1xf32> to vector<1xf32>
    %96 = vector.shape_cast %95 : vector<1xf32> to vector<1x1xf32>
    %cst_33 = arith.constant dense<0.000000e+00> : vector<8xf32>
    %97 = vector.multi_reduction <add>, %92, %cst_33 [1] : vector<8x128xf32> to vector<8xf32>
    %98 = vector.shape_cast %97 : vector<8xf32> to vector<8x1xf32>
    %cst_34 = arith.constant dense<0.000000e+00> : vector<1xf32>
    %99 = vector.multi_reduction <add>, %98, %cst_34 [0] : vector<8x1xf32> to vector<1xf32>
    %100 = vector.shape_cast %99 : vector<1xf32> to vector<1x1xf32>
    %cst_35 = arith.constant 5.000000e-01 : f32
    %101 = vector.broadcast %cst_35 : f32 to vector<1x1xf32>
    %102 = arith.mulf %101, %100 : vector<1x1xf32>
    %103 = arith.addf %96, %102 : vector<1x1xf32>
    %c0_36 = arith.constant 0 : index
    %c0_37 = arith.constant 0 : index
    %104 = vector.load %arg7[%c0_36, %c0_37] : memref<1x1xf32, #tpu.memory_space<vmem>>, vector<1x1xf32>
    %105 = arith.addf %104, %103 : vector<1x1xf32>
    %c0_38 = arith.constant 0 : index
    %c0_39 = arith.constant 0 : index
    %106 = vector.load %arg7[%c0_38, %c0_39] : memref<1x1xf32, #tpu.memory_space<vmem>>, vector<1x1xf32>
    tpu.vector_store %arg7[%c0_38, %c0_39], %105 {strides = array<i32>} : memref<1x1xf32, #tpu.memory_space<vmem>>, vector<1x1xf32>,
    return
  }
  func.func @transform_0(%arg0: i32) -> (i32, i32) {
    %c0_i32 = arith.constant 0 : i32
    %c0_i32_0 = arith.constant 0 : i32
    return %arg0, %c0_i32 : i32, i32
  }
  func.func @transform_1(%arg0: i32) -> (i32, i32) {
    %c0_i32 = arith.constant 0 : i32
    %c0_i32_0 = arith.constant 0 : i32
    return %arg0, %c0_i32 : i32, i32
  }
  func.func @transform_2(%arg0: i32) -> (i32, i32) {
    %c0_i32 = arith.constant 0 : i32
    %c0_i32_0 = arith.constant 0 : i32
    return %arg0, %c0_i32 : i32, i32
  }
  func.func @transform_3(%arg0: i32) -> (i32, i32) {
    %c0_i32 = arith.constant 0 : i32
    %c0_i32_0 = arith.constant 0 : i32
    return %arg0, %c0_i32 : i32, i32
  }
  func.func @transform_4(%arg0: i32) -> (i32, i32) {
    %c0_i32 = arith.constant 0 : i32
    %c0_i32_0 = arith.constant 0 : i32
    return %arg0, %c0_i32 : i32, i32
  }
  func.func @transform_5(%arg0: i32) -> (i32, i32) {
    %c0_i32 = arith.constant 0 : i32
    %c0_i32_0 = arith.constant 0 : i32
    return %arg0, %c0_i32 : i32, i32
  }
  func.func @transform_6(%arg0: i32) -> (i32, i32) {
    %c0_i32 = arith.constant 0 : i32
    %c0_i32_0 = arith.constant 0 : i32
    %c0_i32_1 = arith.constant 0 : i32
    return %c0_i32, %c0_i32_0 : i32, i32
  }
}

module attributes {stable_mosaic.version = 11 : i64} {
  func.func @_v_loglik_kernel(%arg0: i32, %arg1: memref<16x8xf32, #tpu.memory_space<vmem>>, %arg2: memref<8x128xf32, #tpu.memory_space<vmem>>, %arg3: memref<8x128xf32, #tpu.memory_space<vmem>>, %arg4: memref<1x128xf32, #tpu.memory_space<vmem>>, %arg5: memref<1x128xf32, #tpu.memory_space<vmem>>, %arg6: memref<16x128xf32, #tpu.memory_space<vmem>>, %arg7: memref<16x128xf32, #tpu.memory_space<vmem>>, %arg8: memref<16x2xf32, #tpu.memory_space<vmem>>, %arg9: memref<1x1xf32, #tpu.memory_space<vmem>>) attributes {dimension_semantics = [#tpu.dimension_semantics<arbitrary>], iteration_bounds = array<i64: 1>, scalar_prefetch = 0 : i64, scratch_operands = 0 : i64, tpu.core_type = #tpu.core_type<tc>, window_params = [{transform_indices = @transform_0, window_bounds = array<i64: 16, 8>}, {pipeline_mode = #tpu.pipeline_mode<synchronous>, transform_indices = @transform_1, window_bounds = array<i64: 8, 128>}, {pipeline_mode = #tpu.pipeline_mode<synchronous>, transform_indices = @transform_2, window_bounds = array<i64: 8, 128>}, {pipeline_mode = #tpu.pipeline_mode<synchronous>, transform_indices = @transform_3, window_bounds = array<i64: 1, 128>}, {pipeline_mode = #tpu.pipeline_mode<synchronous>, transform_indices = @transform_4, window_bounds = array<i64: 1, 128>}, {transform_indices = @transform_5, window_bounds = array<i64: 16, 128>}, {transform_indices = @transform_6, window_bounds = array<i64: 16, 128>}, {transform_indices = @transform_7, window_bounds = array<i64: 16, 2>}, {pipeline_mode = #tpu.pipeline_mode<synchronous>, transform_indices = @transform_8, window_bounds = array<i64: 1, 1>}]} {
    %c0_i32 = arith.constant 0 : i32
    %0 = arith.cmpi eq, %arg0, %c0_i32 : i32
    %1 = arith.extui %0 : i1 to i32
    %c0_i32_0 = arith.constant 0 : i32
    %2 = arith.cmpi ne, %1, %c0_i32_0 : i32
    scf.if %2 {
      %c0_27 = arith.constant 0 : index
      %c0_28 = arith.constant 0 : index
      %47 = vector.load %arg2[%c0_27, %c0_28] : memref<8x128xf32, #tpu.memory_space<vmem>>, vector<8x128xf32>
      %c0_29 = arith.constant 0 : index
      %c0_30 = arith.constant 0 : index
      %48 = vector.load %arg3[%c0_29, %c0_30] : memref<8x128xf32, #tpu.memory_space<vmem>>, vector<8x128xf32>
      %c0_31 = arith.constant 0 : index
      %c0_32 = arith.constant 0 : index
      %49 = vector.load %arg4[%c0_31, %c0_32] : memref<1x128xf32, #tpu.memory_space<vmem>>, vector<1x128xf32>
      %c0_33 = arith.constant 0 : index
      %c0_34 = arith.constant 0 : index
      %50 = vector.load %arg5[%c0_33, %c0_34] : memref<1x128xf32, #tpu.memory_space<vmem>>, vector<1x128xf32>
      %cst_35 = arith.constant 1.000000e+00 : f32
      %51 = vector.broadcast %cst_35 : f32 to vector<8x128xf32>
      %52 = arith.addf %51, %48 : vector<8x128xf32>
      %53 = arith.mulf %47, %47 : vector<8x128xf32>
      %54 = arith.subf %52, %53 : vector<8x128xf32>
      %55 = math.exp %48 : vector<8x128xf32>
      %56 = arith.subf %54, %55 : vector<8x128xf32>
      %cst_36 = arith.constant 1.000000e+00 : f32
      %57 = vector.broadcast %cst_36 : f32 to vector<1x128xf32>
      %58 = arith.addf %57, %50 : vector<1x128xf32>
      %59 = arith.mulf %49, %49 : vector<1x128xf32>
      %60 = arith.subf %58, %59 : vector<1x128xf32>
      %61 = math.exp %50 : vector<1x128xf32>
      %62 = arith.subf %60, %61 : vector<1x128xf32>
      %cst_37 = arith.constant dense<0.000000e+00> : vector<8xf32>
      %63 = vector.multi_reduction <add>, %56, %cst_37 [1] : vector<8x128xf32> to vector<8xf32>
      %64 = vector.shape_cast %63 : vector<8xf32> to vector<8x1xf32>
      %cst_38 = arith.constant dense<0.000000e+00> : vector<1xf32>
      %65 = vector.multi_reduction <add>, %64, %cst_38 [0] : vector<8x1xf32> to vector<1xf32>
      %66 = vector.shape_cast %65 : vector<1xf32> to vector<1x1xf32>
      %cst_39 = arith.constant dense<0.000000e+00> : vector<1xf32>
      %67 = vector.multi_reduction <add>, %62, %cst_39 [1] : vector<1x128xf32> to vector<1xf32>
      %68 = vector.shape_cast %67 : vector<1xf32> to vector<1x1xf32>
      %cst_40 = arith.constant dense<0.000000e+00> : vector<1xf32>
      %69 = vector.multi_reduction <add>, %68, %cst_40 [0] : vector<1x1xf32> to vector<1xf32>
      %70 = vector.shape_cast %69 : vector<1xf32> to vector<1x1xf32>
      %71 = arith.addf %66, %70 : vector<1x1xf32>
      %cst_41 = arith.constant 5.000000e-01 : f32
      %72 = vector.broadcast %cst_41 : f32 to vector<1x1xf32>
      %73 = arith.mulf %72, %71 : vector<1x1xf32>
      %c0_42 = arith.constant 0 : index
      %c0_43 = arith.constant 0 : index
      %74 = vector.load %arg9[%c0_42, %c0_43] : memref<1x1xf32, #tpu.memory_space<vmem>>, vector<1x1xf32>
      tpu.vector_store %arg9[%c0_42, %c0_43], %73 {strides = array<i32>} : memref<1x1xf32, #tpu.memory_space<vmem>>, vector<1x1xf32>,
    } else {
    }
    %c0 = arith.constant 0 : index
    %c0_1 = arith.constant 0 : index
    %3 = vector.load %arg1[%c0, %c0_1] : memref<16x8xf32, #tpu.memory_space<vmem>>, vector<16x8xf32>
    %c0_2 = arith.constant 0 : index
    %c0_3 = arith.constant 0 : index
    %4 = vector.load %arg2[%c0_2, %c0_3] : memref<8x128xf32, #tpu.memory_space<vmem>>, vector<8x128xf32>
    %cst = arith.constant dense<0.000000e+00> : vector<16x128xf32>
    %5 = tpu.matmul %3, %4, %cst {dimension_numbers = #tpu.dot_dimension_numbers<[1], [0], [0], [1], [0, 0, 1, 1], [], []>} : vector<16x8xf32>, vector<8x128xf32>, vector<16x128xf32> -> vector<16x128xf32>
    %c0_4 = arith.constant 0 : index
    %c0_5 = arith.constant 0 : index
    %6 = vector.load %arg4[%c0_4, %c0_5] : memref<1x128xf32, #tpu.memory_space<vmem>>, vector<1x128xf32>
    %7 = vector.broadcast %6 : vector<1x128xf32> to vector<16x128xf32>
    %8 = arith.addf %5, %7 : vector<16x128xf32>
    %c0_6 = arith.constant 0 : index
    %c0_7 = arith.constant 0 : index
    %9 = vector.load %arg3[%c0_6, %c0_7] : memref<8x128xf32, #tpu.memory_space<vmem>>, vector<8x128xf32>
    %cst_8 = arith.constant dense<0.000000e+00> : vector<16x128xf32>
    %10 = tpu.matmul %3, %9, %cst_8 {dimension_numbers = #tpu.dot_dimension_numbers<[1], [0], [0], [1], [0, 0, 1, 1], [], []>} : vector<16x8xf32>, vector<8x128xf32>, vector<16x128xf32> -> vector<16x128xf32>
    %c0_9 = arith.constant 0 : index
    %c0_10 = arith.constant 0 : index
    %11 = vector.load %arg5[%c0_9, %c0_10] : memref<1x128xf32, #tpu.memory_space<vmem>>, vector<1x128xf32>
    %12 = vector.broadcast %11 : vector<1x128xf32> to vector<16x128xf32>
    %13 = arith.addf %10, %12 : vector<16x128xf32>
    %c0_11 = arith.constant 0 : index
    %c0_12 = arith.constant 0 : index
    %14 = vector.load %arg6[%c0_11, %c0_12] : memref<16x128xf32, #tpu.memory_space<vmem>>, vector<16x128xf32>
    %cst_13 = arith.constant 5.000000e-01 : f32
    %15 = vector.broadcast %cst_13 : f32 to vector<16x128xf32>
    %16 = arith.mulf %15, %13 : vector<16x128xf32>
    %17 = math.exp %16 : vector<16x128xf32>
    %18 = arith.mulf %14, %17 : vector<16x128xf32>
    %19 = arith.addf %8, %18 : vector<16x128xf32>
    %cst_14 = arith.constant dense<0xFF800000> : vector<16xf32>
    %20 = vector.multi_reduction <maximumf>, %19, %cst_14 [1] : vector<16x128xf32> to vector<16xf32>
    %21 = vector.shape_cast %20 : vector<16xf32> to vector<16x1xf32>
    %22 = vector.broadcast %21 : vector<16x1xf32> to vector<16x128xf32>
    %23 = arith.subf %19, %22 : vector<16x128xf32>
    %24 = math.exp %23 : vector<16x128xf32>
    %cst_15 = arith.constant dense<0.000000e+00> : vector<16xf32>
    %25 = vector.multi_reduction <add>, %24, %cst_15 [1] : vector<16x128xf32> to vector<16xf32>
    %26 = vector.shape_cast %25 : vector<16xf32> to vector<16x1xf32>
    %27 = math.log %26 : vector<16x1xf32>
    %28 = arith.addf %21, %27 : vector<16x1xf32>
    %c0_16 = arith.constant 0 : index
    %c0_17 = arith.constant 0 : index
    %29 = vector.load %arg7[%c0_16, %c0_17] : memref<16x128xf32, #tpu.memory_space<vmem>>, vector<16x128xf32>
    %30 = vector.broadcast %28 : vector<16x1xf32> to vector<16x128xf32>
    %31 = arith.subf %19, %30 : vector<16x128xf32>
    %32 = arith.mulf %29, %31 : vector<16x128xf32>
    %cst_18 = arith.constant dense<0.000000e+00> : vector<16xf32>
    %33 = vector.multi_reduction <add>, %32, %cst_18 [1] : vector<16x128xf32> to vector<16xf32>
    %34 = vector.shape_cast %33 : vector<16xf32> to vector<16x1xf32>
    %c0_19 = arith.constant 0 : index
    %c0_20 = arith.constant 0 : index
    %35 = vector.load %arg8[%c0_19, %c0_20] : memref<16x2xf32, #tpu.memory_space<vmem>>, vector<16x2xf32>
    %36 = vector.extract_strided_slice %35 {offsets = [0, 0], sizes = [16, 1], strides = [1, 1]} : vector<16x2xf32> to vector<16x1xf32>
    %37 = vector.extract_strided_slice %35 {offsets = [0, 1], sizes = [16, 1], strides = [1, 1]} : vector<16x2xf32> to vector<16x1xf32>
    %38 = arith.mulf %37, %34 : vector<16x1xf32>
    %39 = arith.addf %36, %38 : vector<16x1xf32>
    %c0_21 = arith.constant 0 : index
    %c0_22 = arith.constant 0 : index
    %40 = vector.load %arg9[%c0_21, %c0_22] : memref<1x1xf32, #tpu.memory_space<vmem>>, vector<1x1xf32>
    %cst_23 = arith.constant dense<0.000000e+00> : vector<1xf32>
    %41 = vector.multi_reduction <add>, %39, %cst_23 [0] : vector<16x1xf32> to vector<1xf32>
    %42 = vector.shape_cast %41 : vector<1xf32> to vector<1x1xf32>
    %cst_24 = arith.constant 2.000000e+00 : f32
    %43 = vector.broadcast %cst_24 : f32 to vector<1x1xf32>
    %44 = arith.mulf %43, %42 : vector<1x1xf32>
    %45 = arith.addf %40, %44 : vector<1x1xf32>
    %c0_25 = arith.constant 0 : index
    %c0_26 = arith.constant 0 : index
    %46 = vector.load %arg9[%c0_25, %c0_26] : memref<1x1xf32, #tpu.memory_space<vmem>>, vector<1x1xf32>
    tpu.vector_store %arg9[%c0_25, %c0_26], %45 {strides = array<i32>} : memref<1x1xf32, #tpu.memory_space<vmem>>, vector<1x1xf32>,
    return
  }
  func.func @transform_0(%arg0: i32) -> (i32, i32) {
    %c0_i32 = arith.constant 0 : i32
    %c0_i32_0 = arith.constant 0 : i32
    return %arg0, %c0_i32 : i32, i32
  }
  func.func @transform_1(%arg0: i32) -> (i32, i32) {
    %c0_i32 = arith.constant 0 : i32
    %c0_i32_0 = arith.constant 0 : i32
    %c0_i32_1 = arith.constant 0 : i32
    return %c0_i32, %c0_i32_0 : i32, i32
  }
  func.func @transform_2(%arg0: i32) -> (i32, i32) {
    %c0_i32 = arith.constant 0 : i32
    %c0_i32_0 = arith.constant 0 : i32
    %c0_i32_1 = arith.constant 0 : i32
    return %c0_i32, %c0_i32_0 : i32, i32
  }
  func.func @transform_3(%arg0: i32) -> (i32, i32) {
    %c0_i32 = arith.constant 0 : i32
    %c0_i32_0 = arith.constant 0 : i32
    %c0_i32_1 = arith.constant 0 : i32
    return %c0_i32, %c0_i32_0 : i32, i32
  }
  func.func @transform_4(%arg0: i32) -> (i32, i32) {
    %c0_i32 = arith.constant 0 : i32
    %c0_i32_0 = arith.constant 0 : i32
    %c0_i32_1 = arith.constant 0 : i32
    return %c0_i32, %c0_i32_0 : i32, i32
  }
  func.func @transform_5(%arg0: i32) -> (i32, i32) {
    %c0_i32 = arith.constant 0 : i32
    %c0_i32_0 = arith.constant 0 : i32
    return %arg0, %c0_i32 : i32, i32
  }
  func.func @transform_6(%arg0: i32) -> (i32, i32) {
    %c0_i32 = arith.constant 0 : i32
    %c0_i32_0 = arith.constant 0 : i32
    return %arg0, %c0_i32 : i32, i32
  }
  func.func @transform_7(%arg0: i32) -> (i32, i32) {
    %c0_i32 = arith.constant 0 : i32
    %c0_i32_0 = arith.constant 0 : i32
    return %arg0, %c0_i32 : i32, i32
  }
  func.func @transform_8(%arg0: i32) -> (i32, i32) {
    %c0_i32 = arith.constant 0 : i32
    %c0_i32_0 = arith.constant 0 : i32
    %c0_i32_1 = arith.constant 0 : i32
    return %c0_i32, %c0_i32_0 : i32, i32
  }
}

</mosaic_0001>

<llo_original>
// kernel: vbayesmm_forward.4
$region0: #{vbayesmm_forward.4}
  #allocation0 [shape = 'u32[]', space=smem, size = 0x4, offset = 0x4, fixed_abs, tag = 'smem constant byte address 0x4 - core index']
  #allocation1 [shape = 'u32[144,128]{1,0:T(1,128)}', space=vmem, size = 0x12000, scoped, tag = 'internal scratch']
  %s0 = inlined_call_operand.vmem [shape: f32[8,256], index: 0, kind: input, shape index: {}]
  %s1 = inlined_call_operand.vmem [shape: f32[8,256], index: 1, kind: input, shape index: {}]
  %s2 = inlined_call_operand.vmem [shape: f32[8,256], index: 2, kind: input, shape index: {}]
  %s3 = inlined_call_operand.vmem [shape: f32[8,256], index: 3, kind: input, shape index: {}]
  %s4 = inlined_call_operand.vmem [shape: f32[8,256], index: 4, kind: input, shape index: {}]
  %s5 = inlined_call_operand.vmem [shape: f32[8,256], index: 5, kind: output, shape index: {0}]
  %s6 = inlined_call_operand.hbm [shape: f32[1,1], index: 6, kind: output, shape index: {1}]
  %7 = xla_tuple %s5, %s6
  %s8 = sld [smem:[#allocation0]]
  $region42: #{vbayesmm_forward.4} parent=0
    _
  %s10 = ssub.s32 1, %s8
  %s11 = scalar_select 0, %s10, %s8
  $region1: #{vbayesmm_forward.4} parent=0
    #allocation2 [shape = 'u8[512]{0}', space=vmem, size = 0x400, scoped, tag = 'output window, operand 1, single buffered']
    #allocation3 [shape = 's32[1]{0}', space=sflag, size = 0x4, scoped, tag = 'scoped memory for vbayesmm_forward.4']
    %12 = vsyncpa [#allocation3], 0
    // Predicated region
    $region2: #{vbayesmm_forward.4} parent=1 // pred_check
      _
    $region3: #{vbayesmm_forward.4} parent=1 // pred_check_branch
      %14 = sbr.rel (0) target = $region5
    $region4: #{vbayesmm_forward.4} parent=1 // pred_region
      _
    $region5: #{vbayesmm_forward.4} parent=1 // pred_fallthru
      _
    // Predicated region
    $region6: #{vbayesmm_forward.4} parent=1 // pred_check
      _
    $region7: #{vbayesmm_forward.4} parent=1 // pred_check_branch
      %16 = sbr.rel (0) target = $region9
    $region8: #{vbayesmm_forward.4} parent=1 // pred_region
      _
    $region9: #{vbayesmm_forward.4} parent=1 // pred_fallthru
      _
    // Predicated region
    $region10: #{vbayesmm_forward.4} parent=1 // pred_check
      _
    $region11: #{vbayesmm_forward.4} parent=1 // pred_check_branch
      %18 = sbr.rel (0) target = $region13
    $region12: #{vbayesmm_forward.4} parent=1 // pred_region
      _
    $region13: #{vbayesmm_forward.4} parent=1 // pred_fallthru
      _
    // Predicated region
    $region14: #{vbayesmm_forward.4} parent=1 // pred_check
      _
    $region15: #{vbayesmm_forward.4} parent=1 // pred_check_branch
      %20 = sbr.rel (0) target = $region17
    $region16: #{vbayesmm_forward.4} parent=1 // pred_region
      _
    $region17: #{vbayesmm_forward.4} parent=1 // pred_fallthru
      _
    // Predicated region
    $region18: #{vbayesmm_forward.4} parent=1 // pred_check
      _
    $region19: #{vbayesmm_forward.4} parent=1 // pred_check_branch
      %22 = sbr.rel (0) target = $region21
    $region20: #{vbayesmm_forward.4} parent=1 // pred_region
      _
    $region21: #{vbayesmm_forward.4} parent=1 // pred_fallthru
      _
    %p23 = scmp.eq.s32.totalorder 0, 0
    // Predicated region
    $region22: #{vbayesmm_forward.4} parent=1 // pred_check
      %p24 = pneg %p23
    $region23: #{vbayesmm_forward.4} parent=1 // pred_check_branch
      %26 = sbr.rel (%p24) target = $region25
    $region24: #{vbayesmm_forward.4} parent=1 // pred_region
      %vm27 = vcmask 0
      %28 = vst.msk [vmem:[#allocation2] sm:$0x1] %vm27, 0.0
    $region25: #{vbayesmm_forward.4} parent=1 // pred_fallthru
      _
    %v29 = vld [vmem:[%s0] sm:$0xff]
    %v30 = vld [vmem:[%s0 + $0x8] sm:$0xff]
    %v31 = vld [vmem:[%s1] sm:$0xff]
    %v32 = vld [vmem:[%s1 + $0x8] sm:$0xff]
    %v33 = vld [vmem:[%s2] sm:$0xff]
    %v34 = vld [vmem:[%s2 + $0x8] sm:$0xff]
    %vm35 = vcmp.gt.f32.partialorder %v31, 20.0
    %vm36 = vcmp.gt.f32.partialorder %v32, 20.0
    %v37 = vmin.f32 %v31, 20.0
    %v38 = vmin.f32 %v32, 20.0
    %v39 = vmul.f32 %v37, 1.442695
    %v40 = vpow.pop %v39
    %v41 = vmul.f32 %v38, 1.442695
    %v42 = vpow.pop %v41
    %v43 = vadd.f32 %v40, 1.0
    %v44 = vadd.f32 %v42, 1.0
    %v45 = vlog2.pop %v43
    %v46 = vmul.f32 %v45, 0.6931472
    %v47 = vlog2.pop %v44
    %v48 = vmul.f32 %v47, 0.6931472
    %v49 = vsel %vm35, %v31, %v46
    %v50 = vsel %vm36, %v32, %v48
    %v51 = vld [vmem:[%s4] sm:$0xff]
    %v52 = vld [vmem:[%s4 + $0x8] sm:$0xff]
    %v53 = vadd.f32 %v33, %v51
    %v54 = vadd.f32 %v34, %v52
    %v55 = vsub.f32 0.0, %v53
    %v56 = vsub.f32 0.0, %v54
    %v57 = vmul.f32 %v55, 2.0
    %v58 = vmul.f32 %v56, 2.0
    %v59 = vmul.f32 %v57, 1.442695
    %v60 = vpow.pop %v59
    %v61 = vmul.f32 %v58, 1.442695
    %v62 = vpow.pop %v61
    %v63 = vadd.f32 %v60, 1.0
    %v64 = vadd.f32 %v62, 1.0
    %v65 = vrcp.pop %v63
    %v66 = vmul.f32 1.0, %v65
    %v67 = vrcp.pop %v64
    %v68 = vmul.f32 1.0, %v67
    %v69 = vld [vmem:[%s3] sm:$0xff]
    %v70 = vld [vmem:[%s3 + $0x8] sm:$0xff]
    %v71 = vmul.f32 %v49, %v69
    %v72 = vmul.f32 %v50, %v70
    %v73 = vadd.f32 %v29, %v71
    %v74 = vadd.f32 %v30, %v72
    %v75 = vmul.f32 %v66, %v73
    %v76 = vmul.f32 %v68, %v74
    %77 = vst [vmem:[%s5] sm:$0xff] %v75
    %78 = vst [vmem:[%s5 + $0x8] sm:$0xff] %v76
    %v79 = vlaneseq
    %v80 = vshrl.u32 %v79, 7
    %s81 = smul.u32 0, 8
    %v82 = vstv %s81
    %v83 = vadd.s32 %v80, %v82
    %v84 = vlaneseq
    %v85 = vand.u32 %v84, 127
    %v86 = vadd.s32 %v85, 128
    %v87 = vand.u32 %v85, 127
    %v88 = vand.u32 %v86, 127
    %v89 = vmul.u32 %v83, 128
    %v90 = vadd.s32 %v89, %v87
    %v91 = vadd.s32 %v89, %v88
    %vm92 = vcmp.lt.s32.totalorder %v90, 144
    %vm93 = vcmp.lt.s32.totalorder %v91, 144
    %v94 = vsel %vm92, 1, 0
    %v95 = vsel %vm93, 1, 0
    %v96 = vcvt.s32.f32 %v94
    %v97 = vcvt.s32.f32 %v95
    %v98 = vsub.f32 0.0, %v33
    %v99 = vsub.f32 0.0, %v34
    %v100 = vmin.f32 %v98, 60.0
    %v101 = vmin.f32 %v99, 60.0
    %v102 = vmul.f32 %v100, 1.442695
    %v103 = vpow.pop %v102
    %v104 = vmul.f32 %v101, 1.442695
    %v105 = vpow.pop %v104
    %v106 = vadd.f32 %v103, 1.0
    %v107 = vadd.f32 %v105, 1.0
    %v108 = vlog2.pop %v106
    %v109 = vmul.f32 %v108, 0.6931472
    %v110 = vlog2.pop %v107
    %v111 = vmul.f32 %v110, 0.6931472
    %v112 = vsub.f32 0.0, %v109
    %v113 = vsub.f32 0.0, %v111
    %v114 = vsub.f32 %v112, %v33
    %v115 = vsub.f32 %v113, %v34
    %v116 = vrcp.pop %v106
    %v117 = vmul.f32 1.0, %v116
    %v118 = vrcp.pop %v107
    %v119 = vmul.f32 1.0, %v118
    %v120 = vsub.f32 %v112, -5.8484035
    %v121 = vsub.f32 %v113, -5.8484035
    %v122 = vmul.f32 %v117, %v120
    %v123 = vmul.f32 %v119, %v121
    %v124 = vsub.f32 1.0, %v117
    %v125 = vsub.f32 1.0, %v119
    %v126 = vsub.f32 %v114, -0.0028886686
    %v127 = vsub.f32 %v115, -0.0028886686
    %v128 = vmul.f32 %v124, %v126
    %v129 = vmul.f32 %v125, %v127
    %v130 = vadd.f32 %v122, %v128
    %v131 = vadd.f32 %v123, %v129
    %v132 = vlog2.pop %v49
    %v133 = vmul.f32 %v132, 0.6931472
    %v134 = vlog2.pop %v50
    %v135 = vmul.f32 %v134, 0.6931472
    %v136 = vsub.f32 0.26236427, %v133
    %v137 = vsub.f32 0.26236427, %v135
    %v138 = vmul.f32 %v49, %v49
    %v139 = vmul.f32 %v50, %v50
    %v140 = vmul.f32 %v29, %v29
    %v141 = vmul.f32 %v30, %v30
    %v142 = vadd.f32 %v138, %v140
    %v143 = vadd.f32 %v139, %v141
    %v144 = vmul.f32 %v142, 0.295858
    %v145 = vmul.f32 %v143, 0.295858
    %v146 = vadd.f32 %v136, %v144
    %v147 = vadd.f32 %v137, %v145
    %v148 = vsub.f32 %v146, 0.5
    %v149 = vsub.f32 %v147, 0.5
    %v150 = vmul.f32 %v117, %v148
    %v151 = vmul.f32 %v119, %v149
    %v152 = vadd.f32 %v130, %v150
    %v153 = vadd.f32 %v131, %v151
    %v154 = vmul.f32 %v152, %v96
    %v155 = vmul.f32 %v153, %v97
    %v156 = vadd.f32 %v76, 1.0
    %v157 = vmul.f32 %v75, %v75
    %v158 = vsub.f32 %v156, %v157
    %v159 = vmul.f32 %v76, 1.442695
    %v160 = vpow.pop %v159
    %v161 = vsub.f32 %v158, %v160
    %v162 = vmul.f32 %v161, %v96
    %v163 = vadd.f32 %v154, %v155
    %164 = vadd.xlane.f32.xlu0 %v163
    %v165 = vpop.xlane.xlu0 %164
    %v166 = vrot.slane %v165, 4
    %v167 = vadd.f32 %v165, %v166
    %v168 = vrot.slane %v167, 2
    %v169 = vadd.f32 %v167, %v168
    %v170 = vrot.slane %v169, 1
    %v171 = vadd.f32 %v169, %v170
    %172 = vadd.xlane.f32.xlu0 %v162
    %v173 = vpop.xlane.xlu0 %172
    %v174 = vrot.slane %v173, 4
    %v175 = vadd.f32 %v173, %v174
    %v176 = vrot.slane %v175, 2
    %v177 = vadd.f32 %v175, %v176
    %v178 = vrot.slane %v177, 1
    %v179 = vadd.f32 %v177, %v178
    %v180 = vmul.f32 %v179, 0.5
    %v181 = vadd.f32 %v171, %v180
    %v182 = vld [vmem:[#allocation2] sm:$0x1]
    %v183 = vadd.f32 %v182, %v181
    %vm184 = vcmask 0
    %185 = vst.msk [vmem:[#allocation2] sm:$0x1] %vm184, %v183
    // Predicated region
    $region26: #{vbayesmm_forward.4} parent=1 // pred_check
      _
    $region27: #{vbayesmm_forward.4} parent=1 // pred_check_branch
      %187 = sbr.rel (0) target = $region29
    $region28: #{vbayesmm_forward.4} parent=1 // pred_region
      _
    $region29: #{vbayesmm_forward.4} parent=1 // pred_fallthru
      _
    // Predicated region
    $region30: #{vbayesmm_forward.4} parent=1 // pred_check
      _
    $region31: #{vbayesmm_forward.4} parent=1 // pred_check_branch
      %189 = sbr.rel (0) target = $region33
    $region32: #{vbayesmm_forward.4} parent=1 // pred_region
      %s191 = ssub.s32 16, 16
      %192 = vsyncadd [#allocation3], %s191
      %s194 = sshll.u32 [#allocation2], 4
      %s195 = int_to_ptr.vmem [resolvable:$true] %s194
      %197 = dma.vmem_to_hbm [thread:$0]  %s195, 16, %s6, [#allocation3]
    $region33: #{vbayesmm_forward.4} parent=1 // pred_fallthru
      _
    // Predicated region
    $region34: #{vbayesmm_forward.4} parent=1 // pred_check
      _
    $region35: #{vbayesmm_forward.4} parent=1 // pred_check_branch
      %199 = sbr.rel (0) target = $region37
    $region36: #{vbayesmm_forward.4} parent=1 // pred_region
      _
    $region37: #{vbayesmm_forward.4} parent=1 // pred_fallthru
      _
    // Predicated region
    $region38: #{vbayesmm_forward.4} parent=1 // pred_check
      _
    $region39: #{vbayesmm_forward.4} parent=1 // pred_check_branch
      %201 = sbr.rel (0) target = $region41
    $region40: #{vbayesmm_forward.4} parent=1 // pred_region
      %202 = dma.done [#allocation3], 16
    $region41: #{vbayesmm_forward.4} parent=1 // pred_fallthru
      _
    %203 = vsyncpa [#allocation3], 1

// kernel: vbayesmm_forward.5
$region0: #{vbayesmm_forward.5}
  #allocation0 [shape = 'u32[]', space=smem, size = 0x4, offset = 0x4, fixed_abs, tag = 'smem constant byte address 0x4 - core index']
  #allocation1 [shape = 'u32[144,128]{1,0:T(1,128)}', space=vmem, size = 0x12000, scoped, tag = 'internal scratch']
  %s0 = inlined_call_operand.vmem [shape: f32[16,8], index: 0, kind: input, shape index: {}]
  %s1 = inlined_call_operand.vmem [shape: f32[8,128], index: 1, kind: input, shape index: {}]
  %s2 = inlined_call_operand.vmem [shape: f32[8,128], index: 2, kind: input, shape index: {}]
  %s3 = inlined_call_operand.vmem [shape: f32[1,128], index: 3, kind: input, shape index: {}]
  %s4 = inlined_call_operand.vmem [shape: f32[1,128], index: 4, kind: input, shape index: {}]
  %s5 = inlined_call_operand.vmem [shape: f32[16,128], index: 5, kind: input, shape index: {}]
  %s6 = inlined_call_operand.vmem [shape: f32[16,128], index: 6, kind: input, shape index: {}]
  %s7 = inlined_call_operand.vmem [shape: f32[16,2], index: 7, kind: input, shape index: {}]
  %s8 = inlined_call_operand.hbm [shape: f32[1,1], index: 8, kind: output, shape index: {}]
  %s9 = sld [smem:[#allocation0]]
  $region46: #{vbayesmm_forward.5} parent=0
    _
  %s11 = ssub.s32 1, %s9
  %s12 = scalar_select 0, %s11, %s9
  $region1: #{vbayesmm_forward.5} parent=0
    #allocation2 [shape = 'u8[512]{0}', space=vmem, size = 0x400, scoped, tag = 'output window, operand 0, single buffered']
    #allocation3 [shape = 's32[1]{0}', space=sflag, size = 0x4, scoped, tag = 'scoped memory for vbayesmm_forward.5']
    %13 = vsyncpa [#allocation3], 0
    // Predicated region
    $region2: #{vbayesmm_forward.5} parent=1 // pred_check
      _
    $region3: #{vbayesmm_forward.5} parent=1 // pred_check_branch
      %15 = sbr.rel (0) target = $region5
    $region4: #{vbayesmm_forward.5} parent=1 // pred_region
      _
    $region5: #{vbayesmm_forward.5} parent=1 // pred_fallthru
      _
    // Predicated region
    $region6: #{vbayesmm_forward.5} parent=1 // pred_check
      _
    $region7: #{vbayesmm_forward.5} parent=1 // pred_check_branch
      %17 = sbr.rel (0) target = $region9
    $region8: #{vbayesmm_forward.5} parent=1 // pred_region
      _
    $region9: #{vbayesmm_forward.5} parent=1 // pred_fallthru
      _
    // Predicated region
    $region10: #{vbayesmm_forward.5} parent=1 // pred_check
      _
    $region11: #{vbayesmm_forward.5} parent=1 // pred_check_branch
      %19 = sbr.rel (0) target = $region13
    $region12: #{vbayesmm_forward.5} parent=1 // pred_region
      _
    $region13: #{vbayesmm_forward.5} parent=1 // pred_fallthru
      _
    // Predicated region
    $region14: #{vbayesmm_forward.5} parent=1 // pred_check
      _
    $region15: #{vbayesmm_forward.5} parent=1 // pred_check_branch
      %21 = sbr.rel (0) target = $region17
    $region16: #{vbayesmm_forward.5} parent=1 // pred_region
      _
    $region17: #{vbayesmm_forward.5} parent=1 // pred_fallthru
      _
    // Predicated region
    $region18: #{vbayesmm_forward.5} parent=1 // pred_check
      _
    $region19: #{vbayesmm_forward.5} parent=1 // pred_check_branch
      %23 = sbr.rel (0) target = $region21
    $region20: #{vbayesmm_forward.5} parent=1 // pred_region
      _
    $region21: #{vbayesmm_forward.5} parent=1 // pred_fallthru
      _
    // Predicated region
    $region22: #{vbayesmm_forward.5} parent=1 // pred_check
      _
    $region23: #{vbayesmm_forward.5} parent=1 // pred_check_branch
      %25 = sbr.rel (0) target = $region25
    $region24: #{vbayesmm_forward.5} parent=1 // pred_region
      _
    $region25: #{vbayesmm_forward.5} parent=1 // pred_fallthru
      _
    // Predicated region
    $region26: #{vbayesmm_forward.5} parent=1 // pred_check
      _
    $region27: #{vbayesmm_forward.5} parent=1 // pred_check_branch
      %27 = sbr.rel (0) target = $region29
    $region28: #{vbayesmm_forward.5} parent=1 // pred_region
      _
    $region29: #{vbayesmm_forward.5} parent=1 // pred_fallthru
      _
    // Predicated region
    $region30: #{vbayesmm_forward.5} parent=1 // pred_check
      _
    $region31: #{vbayesmm_forward.5} parent=1 // pred_check_branch
      %29 = sbr.rel (0) target = $region33
    $region32: #{vbayesmm_forward.5} parent=1 // pred_region
      _
    $region33: #{vbayesmm_forward.5} parent=1 // pred_fallthru
      _
    %p30 = scmp.eq.s32.totalorder 0, 0
    // Predicated region
    $region34: #{vbayesmm_forward.5} parent=1 // pred_check
      %p31 = pneg %p30
    $region35: #{vbayesmm_forward.5} parent=1 // pred_check_branch
      %33 = sbr.rel (%p31) target = $region37
    $region36: #{vbayesmm_forward.5} parent=1 // pred_region
      %v34 = vld [vmem:[%s1] sm:$0xff]
      %v35 = vld [vmem:[%s2] sm:$0xff]
      %v36 = vld [vmem:[%s3] sm:$0x1]
      %v37 = vld [vmem:[%s4] sm:$0x1]
      %v38 = vadd.f32 %v35, 1.0
      %v39 = vmul.f32 %v34, %v34
      %v40 = vsub.f32 %v38, %v39
      %v41 = vmul.f32 %v35, 1.442695
      %v42 = vpow.pop %v41
      %v43 = vsub.f32 %v40, %v42
      %v44 = vadd.f32 %v37, 1.0
      %v45 = vmul.f32 %v36, %v36
      %v46 = vsub.f32 %v44, %v45
      %v47 = vmul.f32 %v37, 1.442695
      %v48 = vpow.pop %v47
      %v49 = vsub.f32 %v46, %v48
      %50 = vadd.xlane.f32.xlu0 %v43
      %v51 = vpop.xlane.xlu0 %50
      %v52 = vrot.slane %v51, 4
      %v53 = vadd.f32 %v51, %v52
      %v54 = vrot.slane %v53, 2
      %v55 = vadd.f32 %v53, %v54
      %v56 = vrot.slane %v55, 1
      %v57 = vadd.f32 %v55, %v56
      %vm58 = vcmask 1040384
      %v59 = vsel %vm58, %v49, 0.0
      %60 = vadd.xlane.f32.xlu0 %v59
      %v61 = vpop.xlane.xlu0 %60
      %v62 = vadd.f32 %v61, 0.0
      %v63 = vadd.f32 %v57, %v62
      %v64 = vmul.f32 %v63, 0.5
      %vm65 = vcmask 0
      %66 = vst.msk [vmem:[#allocation2] sm:$0x1] %vm65, %v64
    $region37: #{vbayesmm_forward.5} parent=1 // pred_fallthru
      _
    %v67 = vld [vmem:[%s0] sm:$0xff]
    %v68 = vld [vmem:[%s0 + $0x8] sm:$0xff]
    %v69 = vld [vmem:[%s1] sm:$0xff]
    %v70 = vld [vmem:[%s3] sm:$0x1]
    %v72 = vlaneseq
    %v73 = vshrl.u32 %v72, 7
    %v74 = vsub.s32 0, %v73
    %v75 = vrot.slane %v70, %v74
    %vm77 = vcmask 64512
    %v79 = vsel %vm77, %v67, 0
    %v82 = vsel %vm77, %v68, 0
    %84 = vmatprep.subr.mxu0 0.0
    %85 = vmatpush1.msra.mxu0 %v69
    %86 = vmatprep.subr.mxu0 0.0
    %87 = vmatpush1.msra.mxu0 0.0
    %88 = vmatprep.subr.mxu0 0.0
    %89 = vmatpush1.msra.mxu0 0.0
    %90 = vmatprep.subr.mxu0 0.0
    %91 = vmatpush1.msra.mxu0 0.0
    %92 = vmatprep.subr.mxu0 0.0
    %93 = vmatpush1.msra.mxu0 0.0
    %94 = vmatprep.subr.mxu0 0.0
    %95 = vmatpush1.msra.mxu0 0.0
    %96 = vmatprep.subr.mxu0 0.0
    %97 = vmatpush1.msra.mxu0 0.0
    %98 = vmatprep.subr.mxu0 0.0
    %99 = vmatpush1.msra.mxu0 0.0
    %100 = vmatprep.subr.mxu0 0.0
    %101 = vmatpush1.msra.mxu0 0.0
    %102 = vmatprep.subr.mxu0 0.0
    %103 = vmatpush1.msra.mxu0 0.0
    %104 = vmatprep.subr.mxu0 0.0
    %105 = vmatpush1.msra.mxu0 0.0
    %106 = vmatprep.subr.mxu0 0.0
    %107 = vmatpush1.msra.mxu0 0.0
    %108 = vmatprep.subr.mxu0 0.0
    %109 = vmatpush1.msra.mxu0 0.0
    %110 = vmatprep.subr.mxu0 0.0
    %111 = vmatpush1.msra.mxu0 0.0
    %112 = vmatprep.subr.mxu0 0.0
    %113 = vmatpush1.msra.mxu0 0.0
    %114 = vmatprep.subr.mxu0 0.0
    %115 = vmatpush1.msra.mxu0 0.0
    %116 = vmatprep.subr.mxu0 0.0
    %117 = vmatpush1.msra.mxu0 0.0
    %118 = vmatprep.subr.mxu0 0.0
    %119 = vmatpush1.msra.mxu0 0.0
    %120 = vmatprep.subr.mxu0 0.0
    %121 = vmatpush1.msra.mxu0 0.0
    %122 = vmatprep.subr.mxu0 0.0
    %123 = vmatpush1.msra.mxu0 0.0
    %124 = vmatprep.subr.mxu0 0.0
    %125 = vmatpush1.msra.mxu0 0.0
    %126 = vmatprep.subr.mxu0 0.0
    %127 = vmatpush1.msra.mxu0 0.0
    %128 = vmatprep.subr.mxu0 0.0
    %129 = vmatpush1.msra.mxu0 0.0
    %130 = vmatprep.subr.mxu0 0.0
    %131 = vmatpush1.msra.mxu0 0.0
    %132 = vmatprep.subr.mxu0 0.0
    %133 = vmatpush1.msra.mxu0 0.0
    %134 = vmatprep.subr.mxu0 0.0
    %135 = vmatpush1.msra.mxu0 0.0
    %136 = vmatprep.subr.mxu0 0.0
    %137 = vmatpush1.msra.mxu0 0.0
    %138 = vmatprep.subr.mxu0 0.0
    %139 = vmatpush1.msra.mxu0 0.0
    %140 = vmatprep.subr.mxu0 0.0
    %141 = vmatpush1.msra.mxu0 0.0
    %142 = vmatprep.subr.mxu0 0.0
    %143 = vmatpush1.msra.mxu0 0.0
    %144 = vmatprep.subr.mxu0 0.0
    %145 = vmatpush1.msra.mxu0 0.0
    %146 = vmatprep.subr.mxu0 0.0
    %147 = vmatpush1.msra.mxu0 0.0
    %148 = vmatprep.mubr.f32.mxu0 0.0
    %149 = vmatmul.mubr.f32.gmra.mrb[0].mxu0 %v79
    %v150 = vpop.f32.mrb[0].mxu0
    %v151 = vadd.f32 %v75, %v150
    %v152 = vpop.f32.mrb[0].mxu0
    %153 = vmatprep.mubr.f32.mxu0 0.0
    %154 = vmatmul.mubr.f32.gmra.mrb[0].mxu0 %v82
    %v155 = vpop.f32.mrb[0].mxu0
    %v156 = vadd.f32 %v75, %v155
    %v157 = vpop.f32.mrb[0].mxu0
    %158 = vdwg.mxu0
    %v159 = vld [vmem:[%s2] sm:$0xff]
    %v160 = vld [vmem:[%s4] sm:$0x1]
    %v162 = vlaneseq
    %v163 = vshrl.u32 %v162, 7
    %v164 = vsub.s32 0, %v163
    %v165 = vrot.slane %v160, %v164
    %167 = vmatprep.subr.mxu0 0.0
    %168 = vmatpush1.msra.mxu0 %v159
    %169 = vmatprep.subr.mxu0 0.0
    %170 = vmatpush1.msra.mxu0 0.0
    %171 = vmatprep.subr.mxu0 0.0
    %172 = vmatpush1.msra.mxu0 0.0
    %173 = vmatprep.subr.mxu0 0.0
    %174 = vmatpush1.msra.mxu0 0.0
    %175 = vmatprep.subr.mxu0 0.0
    %176 = vmatpush1.msra.mxu0 0.0
    %177 = vmatprep.subr.mxu0 0.0
    %178 = vmatpush1.msra.mxu0 0.0
    %179 = vmatprep.subr.mxu0 0.0
    %180 = vmatpush1.msra.mxu0 0.0
    %181 = vmatprep.subr.mxu0 0.0
    %182 = vmatpush1.msra.mxu0 0.0
    %183 = vmatprep.subr.mxu0 0.0
    %184 = vmatpush1.msra.mxu0 0.0
    %185 = vmatprep.subr.mxu0 0.0
    %186 = vmatpush1.msra.mxu0 0.0
    %187 = vmatprep.subr.mxu0 0.0
    %188 = vmatpush1.msra.mxu0 0.0
    %189 = vmatprep.subr.mxu0 0.0
    %190 = vmatpush1.msra.mxu0 0.0
    %191 = vmatprep.subr.mxu0 0.0
    %192 = vmatpush1.msra.mxu0 0.0
    %193 = vmatprep.subr.mxu0 0.0
    %194 = vmatpush1.msra.mxu0 0.0
    %195 = vmatprep.subr.mxu0 0.0
    %196 = vmatpush1.msra.mxu0 0.0
    %197 = vmatprep.subr.mxu0 0.0
    %198 = vmatpush1.msra.mxu0 0.0
    %199 = vmatprep.subr.mxu0 0.0
    %200 = vmatpush1.msra.mxu0 0.0
    %201 = vmatprep.subr.mxu0 0.0
    %202 = vmatpush1.msra.mxu0 0.0
    %203 = vmatprep.subr.mxu0 0.0
    %204 = vmatpush1.msra.mxu0 0.0
    %205 = vmatprep.subr.mxu0 0.0
    %206 = vmatpush1.msra.mxu0 0.0
    %207 = vmatprep.subr.mxu0 0.0
    %208 = vmatpush1.msra.mxu0 0.0
    %209 = vmatprep.subr.mxu0 0.0
    %210 = vmatpush1.msra.mxu0 0.0
    %211 = vmatprep.subr.mxu0 0.0
    %212 = vmatpush1.msra.mxu0 0.0
    %213 = vmatprep.subr.mxu0 0.0
    %214 = vmatpush1.msra.mxu0 0.0
    %215 = vmatprep.subr.mxu0 0.0
    %216 = vmatpush1.msra.mxu0 0.0
    %217 = vmatprep.subr.mxu0 0.0
    %218 = vmatpush1.msra.mxu0 0.0
    %219 = vmatprep.subr.mxu0 0.0
    %220 = vmatpush1.msra.mxu0 0.0
    %221 = vmatprep.subr.mxu0 0.0
    %222 = vmatpush1.msra.mxu0 0.0
    %223 = vmatprep.subr.mxu0 0.0
    %224 = vmatpush1.msra.mxu0 0.0
    %225 = vmatprep.subr.mxu0 0.0
    %226 = vmatpush1.msra.mxu0 0.0
    %227 = vmatprep.subr.mxu0 0.0
    %228 = vmatpush1.msra.mxu0 0.0
    %229 = vmatprep.subr.mxu0 0.0
    %230 = vmatpush1.msra.mxu0 0.0
    %231 = vmatprep.mubr.f32.mxu0 0.0
    %232 = vmatmul.mubr.f32.gmra.mrb[0].mxu0 %v79
    %v233 = vpop.f32.mrb[0].mxu0
    %v234 = vadd.f32 %v165, %v233
    %v235 = vpop.f32.mrb[0].mxu0
    %236 = vmatprep.mubr.f32.mxu0 0.0
    %237 = vmatmul.mubr.f32.gmra.mrb[0].mxu0 %v82
    %v238 = vpop.f32.mrb[0].mxu0
    %v239 = vadd.f32 %v165, %v238
    %v240 = vpop.f32.mrb[0].mxu0
    %241 = vdwg.mxu0
    %v242 = vld [vmem:[%s5] sm:$0xff]
    %v243 = vld [vmem:[%s5 + $0x8] sm:$0xff]
    %v244 = vmul.f32 %v234, 0.5
    %v245 = vmul.f32 %v239, 0.5
    %v246 = vmul.f32 %v244, 1.442695
    %v247 = vpow.pop %v246
    %v248 = vmul.f32 %v245, 1.442695
    %v249 = vpow.pop %v248
    %v250 = vmul.f32 %v242, %v247
    %v251 = vmul.f32 %v243, %v249
    %v252 = vadd.f32 %v151, %v250
    %v253 = vadd.f32 %v156, %v251
    %254 = vmax.xlane.f32.xlu0 %v252
    %v255 = vpop.xlane.xlu0 %254
    %256 = vmax.xlane.f32.xlu0 %v253
    %v257 = vpop.xlane.xlu0 %256
    %v258 = vsub.f32 %v252, %v255
    %v259 = vsub.f32 %v253, %v257
    %v260 = vmul.f32 %v258, 1.442695
    %v261 = vpow.pop %v260
    %v262 = vmul.f32 %v259, 1.442695
    %v263 = vpow.pop %v262
    %264 = vadd.xlane.f32.xlu0 %v261
    %v265 = vpop.xlane.xlu0 %264
    %266 = vadd.xlane.f32.xlu0 %v263
    %v267 = vpop.xlane.xlu0 %266
    %v268 = vlog2.pop %v265
    %v269 = vmul.f32 %v268, 0.6931472
    %v270 = vlog2.pop %v267
    %v271 = vmul.f32 %v270, 0.6931472
    %v272 = vadd.f32 %v255, %v269
    %v273 = vadd.f32 %v257, %v271
    %v274 = vld [vmem:[%s6] sm:$0xff]
    %v275 = vld [vmem:[%s6 + $0x8] sm:$0xff]
    %v276 = vsub.f32 %v252, %v272
    %v277 = vsub.f32 %v253, %v273
    %v278 = vmul.f32 %v274, %v276
    %v279 = vmul.f32 %v275, %v277
    %280 = vadd.xlane.f32.xlu0 %v278
    %v281 = vpop.xlane.xlu0 %280
    %282 = vadd.xlane.f32.xlu0 %v279
    %v283 = vpop.xlane.xlu0 %282
    %v284 = vld [vmem:[%s7] sm:$0xff]
    %v285 = vld [vmem:[%s7 + $0x8] sm:$0xff]
    %v286 = vmul.f32 %v284, %v281
    %v287 = vmul.f32 %v285, %v283
    %290 = vrot.lane.b32.xlu0 %v286, 127
    %v291 = vpop.permute.xlu0 %290
    %292 = vrot.lane.b32.xlu0 %v287, 127
    %v293 = vpop.permute.xlu0 %292
    %v296 = vadd.f32 %v284, %v291
    %v297 = vadd.f32 %v285, %v293
    %v298 = vld [vmem:[#allocation2] sm:$0x1]
    %vm299 = vcmask 7168
    %v300 = vsel %vm299, %v296, 0.0
    %v301 = vsel %vm299, %v297, 0.0
    %v302 = vadd.f32 %v300, %v301
    %v303 = vrot.slane %v302, 4
    %v304 = vadd.f32 %v302, %v303
    %v305 = vrot.slane %v304, 2
    %v306 = vadd.f32 %v304, %v305
    %v307 = vrot.slane %v306, 1
    %v308 = vadd.f32 %v306, %v307
    %v309 = vmul.f32 %v308, 2.0
    %v310 = vadd.f32 %v298, %v309
    %vm311 = vcmask 0
    %312 = vst.msk [vmem:[#allocation2] sm:$0x1] %vm311, %v310
    // Predicated region
    $region38: #{vbayesmm_forward.5} parent=1 // pred_check
      _
    $region39: #{vbayesmm_forward.5} parent=1 // pred_check_branch
      %314 = sbr.rel (0) target = $region41
    $region40: #{vbayesmm_forward.5} parent=1 // pred_region
      %s316 = ssub.s32 16, 16
      %317 = vsyncadd [#allocation3], %s316
      %s319 = sshll.u32 [#allocation2], 4
      %s320 = int_to_ptr.vmem [resolvable:$true] %s319
      %322 = dma.vmem_to_hbm [thread:$0]  %s320, 16, %s8, [#allocation3]
    $region41: #{vbayesmm_forward.5} parent=1 // pred_fallthru
      _
    // Predicated region
    $region42: #{vbayesmm_forward.5} parent=1 // pred_check
      _
    $region43: #{vbayesmm_forward.5} parent=1 // pred_check_branch
      %324 = sbr.rel (0) target = $region45
    $region44: #{vbayesmm_forward.5} parent=1 // pred_region
      %325 = dma.done [#allocation3], 16
    $region45: #{vbayesmm_forward.5} parent=1 // pred_fallthru
      _
    %326 = vsyncpa [#allocation3], 1

</llo_original>
